<compile_context>
chip_gen: v7x
topology: tpu7x:2x2x1
jax: 0.10.0
libtpu: 0.0.40
codegen_flags: <defaults>
</compile_context>

<pallas_src>
import jax
import jax.numpy as jnp
from jax.experimental import pallas as pl
from jax.experimental.pallas import tpu as pltpu


def _round_up(x, m):
    return (x + m - 1) // m * m


def _graph_mlp_kernel(x_ref,
                      w1_ref, b1_ref,
                      w2_ref, b2_ref,
                      w3_ref, b3_ref,
                      w4_ref, b4_ref,
                      w5_ref, b5_ref,
                      out_ref):
    # Batch-on-lanes layout: x_ref is (input_dim, batch_tile).
    compute_dtype = x_ref.dtype

    def layer(h, w_ref, b_ref, relu):
        # MXU matmul in bf16 with f32 accumulation; bias (out, 1) broadcasts
        # over the batch (lane) axis.
        acc = jnp.dot(w_ref[...], h, preferred_element_type=jnp.float32)
        acc = acc + b_ref[...]
        if relu:
            acc = jnp.maximum(acc, 0.0)          # f32 on the VPU
            acc = acc.astype(compute_dtype)      # bf16 operand for next matmul
        return acc

    h = x_ref[...]
    h = layer(h, w1_ref, b1_ref, relu=True)
    h = layer(h, w2_ref, b2_ref, relu=True)
    h = layer(h, w3_ref, b3_ref, relu=True)
    h = layer(h, w4_ref, b4_ref, relu=True)
    out = layer(h, w5_ref, b5_ref, relu=False)
    out_ref[...] = out.astype(out_ref.dtype)


def graph_mlp_forward(x, params, *, batch_tile=None, compute_dtype=jnp.bfloat16):
    """Run the GraphMLP forward pass with a fused Pallas kernel.

    x: (batch, 2 * max_num_edges) float32
    params: dict with w1..w5 in PyTorch (out, in) order and b1..b5 as (out, 1)
    Returns (batch, output_dim) in x.dtype.
    """
    batch, input_dim = x.shape
    output_dim = params["w5"].shape[0]

    # Lane-dense, 128-aligned batch tiling (multiple grid steps -> pipelining,
    # megacore sharding on v7x).  Tile stays a few MiB even for the full-size
    # model (2048 rows x 2450 feats x 2 B ~= 10 MiB per buffer), safely inside
    # the scoped VMEM limit on v5e/v6e/v7x with double buffering.
    if batch_tile is None:
        batch_tile = min(2048, _round_up(batch, 128))
    batch_tile = max(128, _round_up(batch_tile, 128))
    padded_batch = _round_up(batch, batch_tile)

    # Transposed activation layout: features on sublanes, batch on lanes.
    x_t = x.T.astype(compute_dtype)
    if padded_batch != batch:
        x_t = jnp.pad(x_t, ((0, 0), (0, padded_batch - batch)))

    grid = (padded_batch // batch_tile,)

    def _resident_spec(shape):
        # Same block every grid step -> stays in VMEM, no re-DMA.
        return pl.BlockSpec(shape, lambda i: (0, 0))

    in_specs = [pl.BlockSpec((input_dim, batch_tile), lambda i: (0, i))]
    operands = [x_t]
    for idx in range(1, 6):
        w = params[f"w{idx}"].astype(compute_dtype)   # (out, in)  bf16 MXU operand
        b = params[f"b{idx}"].astype(jnp.float32)     # (out, 1)   f32 bias add
        in_specs.append(_resident_spec(w.shape))
        in_specs.append(_resident_spec(b.shape))
        operands.extend([w, b])

    out_spec = pl.BlockSpec((output_dim, batch_tile), lambda i: (0, i))

    fn = pl.pallas_call(
        _graph_mlp_kernel,
        out_shape=jax.ShapeDtypeStruct((output_dim, padded_batch), jnp.float32),
        grid_spec=pltpu.PrefetchScalarGridSpec(
            num_scalar_prefetch=0,
            grid=grid,
            in_specs=in_specs,
            out_specs=out_spec,
        ),
        compiler_params=pltpu.CompilerParams(
            dimension_semantics=("parallel",),
            vmem_limit_bytes=32 * 1024 * 1024,
        ),
    )

    out_t = fn(*operands)                      # (output_dim, padded_batch) f32
    return out_t[:, :batch].T.astype(x.dtype)  # (batch, output_dim)


def init_graph_mlp_params(key, max_num_edges, hidden_dim, output_dim):
    """Deterministic init mimicking PyTorch nn.Linear default:
    U(-1/sqrt(fan_in), 1/sqrt(fan_in)); weights kept in (out, in) order,
    biases as (out, 1)."""
    input_dim = 2 * max_num_edges
    dims = [(hidden_dim, input_dim),
            (hidden_dim, hidden_dim),
            (hidden_dim, hidden_dim),
            (hidden_dim, hidden_dim),
            (output_dim, hidden_dim)]
    params = {}
    for idx, (fan_out, fan_in) in enumerate(dims, start=1):
        key, kw, kb = jax.random.split(key, 3)
        bound = 1.0 / float(fan_in) ** 0.5
        params[f"w{idx}"] = jax.random.uniform(
            kw, (fan_out, fan_in), jnp.float32, -bound, bound)
        params[f"b{idx}"] = jax.random.uniform(
            kb, (fan_out, 1), jnp.float32, -bound, bound)
    return params


def graph_mlp_reference(x, params):
    """Pure-JAX f32 reference for correctness check."""
    h = x
    for idx in range(1, 5):
        h = jnp.maximum(h @ params[f"w{idx}"].T + params[f"b{idx}"].T, 0.0)
    return h @ params["w5"].T + params["b5"].T


if __name__ == "__main__":
    # Small synthetic shapes consistent with GraphMLP's forward:
    # input_dim = 2 * max_num_edges, 4 hidden ReLU layers, output_dim = 1.
    max_num_edges = 16          # -> input_dim = 32
    hidden_dim = 32
    output_dim = 1
    batch = 300                 # not a multiple of the tile: exercises padding,
                                # and gives a multi-step grid (tile=128 -> 3 steps)

    key = jax.random.PRNGKey(0)
    key, kx = jax.random.split(key)
    params = init_graph_mlp_params(key, max_num_edges, hidden_dim, output_dim)
    x = jax.random.normal(kx, (batch, 2 * max_num_edges), jnp.float32)

    out = graph_mlp_forward(x, params, batch_tile=128)
    out = jax.block_until_ready(out)

    ref = graph_mlp_reference(x, params)
    assert out.shape == (batch, output_dim)
    # bf16 matmul operands with f32 accumulation -> loosened tolerance.
    assert jnp.allclose(out, ref, atol=5e-2, rtol=5e-2), \
        float(jnp.max(jnp.abs(out - ref)))

    print("KERNEL_OK")
</pallas_src>

<mosaic_0001>
module attributes {stable_mosaic.version = 11 : i64} {
  func.func @_graph_mlp_kernel(%arg0: i32, %arg1: memref<32x128xbf16, #tpu.memory_space<vmem>>, %arg2: memref<32x32xbf16, #tpu.memory_space<vmem>>, %arg3: memref<32x1xf32, #tpu.memory_space<vmem>>, %arg4: memref<32x32xbf16, #tpu.memory_space<vmem>>, %arg5: memref<32x1xf32, #tpu.memory_space<vmem>>, %arg6: memref<32x32xbf16, #tpu.memory_space<vmem>>, %arg7: memref<32x1xf32, #tpu.memory_space<vmem>>, %arg8: memref<32x32xbf16, #tpu.memory_space<vmem>>, %arg9: memref<32x1xf32, #tpu.memory_space<vmem>>, %arg10: memref<1x32xbf16, #tpu.memory_space<vmem>>, %arg11: memref<1x1xf32, #tpu.memory_space<vmem>>, %arg12: memref<1x128xf32, #tpu.memory_space<vmem>>) attributes {dimension_semantics = [#tpu.dimension_semantics<parallel>], iteration_bounds = array<i64: 3>, scalar_prefetch = 0 : i64, scratch_operands = 0 : i64, tpu.core_type = #tpu.core_type<tc>, window_params = [{transform_indices = @transform_0, window_bounds = array<i64: 32, 128>}, {pipeline_mode = #tpu.pipeline_mode<synchronous>, transform_indices = @transform_1, window_bounds = array<i64: 32, 32>}, {pipeline_mode = #tpu.pipeline_mode<synchronous>, transform_indices = @transform_2, window_bounds = array<i64: 32, 1>}, {pipeline_mode = #tpu.pipeline_mode<synchronous>, transform_indices = @transform_3, window_bounds = array<i64: 32, 32>}, {pipeline_mode = #tpu.pipeline_mode<synchronous>, transform_indices = @transform_4, window_bounds = array<i64: 32, 1>}, {pipeline_mode = #tpu.pipeline_mode<synchronous>, transform_indices = @transform_5, window_bounds = array<i64: 32, 32>}, {pipeline_mode = #tpu.pipeline_mode<synchronous>, transform_indices = @transform_6, window_bounds = array<i64: 32, 1>}, {pipeline_mode = #tpu.pipeline_mode<synchronous>, transform_indices = @transform_7, window_bounds = array<i64: 32, 32>}, {pipeline_mode = #tpu.pipeline_mode<synchronous>, transform_indices = @transform_8, window_bounds = array<i64: 32, 1>}, {pipeline_mode = #tpu.pipeline_mode<synchronous>, transform_indices = @transform_9, window_bounds = array<i64: 1, 32>}, {pipeline_mode = #tpu.pipeline_mode<synchronous>, transform_indices = @transform_10, window_bounds = array<i64: 1, 1>}, {transform_indices = @transform_11, window_bounds = array<i64: 1, 128>}]} {
    %c0 = arith.constant 0 : index
    %c0_0 = arith.constant 0 : index
    %0 = vector.load %arg1[%c0, %c0_0] : memref<32x128xbf16, #tpu.memory_space<vmem>>, vector<32x128xbf16>
    %c0_1 = arith.constant 0 : index
    %c0_2 = arith.constant 0 : index
    %1 = vector.load %arg2[%c0_1, %c0_2] : memref<32x32xbf16, #tpu.memory_space<vmem>>, vector<32x32xbf16>
    %cst = arith.constant dense<0.000000e+00> : vector<32x128xf32>
    %2 = tpu.matmul %1, %0, %cst {dimension_numbers = #tpu.dot_dimension_numbers<[1], [0], [0], [1], [0, 0, 1, 1], [], []>} : vector<32x32xbf16>, vector<32x128xbf16>, vector<32x128xf32> -> vector<32x128xf32>
    %c0_3 = arith.constant 0 : index
    %c0_4 = arith.constant 0 : index
    %3 = vector.load %arg3[%c0_3, %c0_4] : memref<32x1xf32, #tpu.memory_space<vmem>>, vector<32x1xf32>
    %4 = vector.broadcast %3 : vector<32x1xf32> to vector<32x128xf32>
    %5 = arith.addf %2, %4 : vector<32x128xf32>
    %cst_5 = arith.constant 0.000000e+00 : f32
    %6 = vector.broadcast %cst_5 : f32 to vector<32x128xf32>
    %7 = arith.maximumf %5, %6 : vector<32x128xf32>
    %8 = arith.truncf %7 : vector<32x128xf32> to vector<32x128xbf16>
    %c0_6 = arith.constant 0 : index
    %c0_7 = arith.constant 0 : index
    %9 = vector.load %arg4[%c0_6, %c0_7] : memref<32x32xbf16, #tpu.memory_space<vmem>>, vector<32x32xbf16>
    %cst_8 = arith.constant dense<0.000000e+00> : vector<32x128xf32>
    %10 = tpu.matmul %9, %8, %cst_8 {dimension_numbers = #tpu.dot_dimension_numbers<[1], [0], [0], [1], [0, 0, 1, 1], [], []>} : vector<32x32xbf16>, vector<32x128xbf16>, vector<32x128xf32> -> vector<32x128xf32>
    %c0_9 = arith.constant 0 : index
    %c0_10 = arith.constant 0 : index
    %11 = vector.load %arg5[%c0_9, %c0_10] : memref<32x1xf32, #tpu.memory_space<vmem>>, vector<32x1xf32>
    %12 = vector.broadcast %11 : vector<32x1xf32> to vector<32x128xf32>
    %13 = arith.addf %10, %12 : vector<32x128xf32>
    %cst_11 = arith.constant 0.000000e+00 : f32
    %14 = vector.broadcast %cst_11 : f32 to vector<32x128xf32>
    %15 = arith.maximumf %13, %14 : vector<32x128xf32>
    %16 = arith.truncf %15 : vector<32x128xf32> to vector<32x128xbf16>
    %c0_12 = arith.constant 0 : index
    %c0_13 = arith.constant 0 : index
    %17 = vector.load %arg6[%c0_12, %c0_13] : memref<32x32xbf16, #tpu.memory_space<vmem>>, vector<32x32xbf16>
    %cst_14 = arith.constant dense<0.000000e+00> : vector<32x128xf32>
    %18 = tpu.matmul %17, %16, %cst_14 {dimension_numbers = #tpu.dot_dimension_numbers<[1], [0], [0], [1], [0, 0, 1, 1], [], []>} : vector<32x32xbf16>, vector<32x128xbf16>, vector<32x128xf32> -> vector<32x128xf32>
    %c0_15 = arith.constant 0 : index
    %c0_16 = arith.constant 0 : index
    %19 = vector.load %arg7[%c0_15, %c0_16] : memref<32x1xf32, #tpu.memory_space<vmem>>, vector<32x1xf32>
    %20 = vector.broadcast %19 : vector<32x1xf32> to vector<32x128xf32>
    %21 = arith.addf %18, %20 : vector<32x128xf32>
    %cst_17 = arith.constant 0.000000e+00 : f32
    %22 = vector.broadcast %cst_17 : f32 to vector<32x128xf32>
    %23 = arith.maximumf %21, %22 : vector<32x128xf32>
    %24 = arith.truncf %23 : vector<32x128xf32> to vector<32x128xbf16>
    %c0_18 = arith.constant 0 : index
    %c0_19 = arith.constant 0 : index
    %25 = vector.load %arg8[%c0_18, %c0_19] : memref<32x32xbf16, #tpu.memory_space<vmem>>, vector<32x32xbf16>
    %cst_20 = arith.constant dense<0.000000e+00> : vector<32x128xf32>
    %26 = tpu.matmul %25, %24, %cst_20 {dimension_numbers = #tpu.dot_dimension_numbers<[1], [0], [0], [1], [0, 0, 1, 1], [], []>} : vector<32x32xbf16>, vector<32x128xbf16>, vector<32x128xf32> -> vector<32x128xf32>
    %c0_21 = arith.constant 0 : index
    %c0_22 = arith.constant 0 : index
    %27 = vector.load %arg9[%c0_21, %c0_22] : memref<32x1xf32, #tpu.memory_space<vmem>>, vector<32x1xf32>
    %28 = vector.broadcast %27 : vector<32x1xf32> to vector<32x128xf32>
    %29 = arith.addf %26, %28 : vector<32x128xf32>
    %cst_23 = arith.constant 0.000000e+00 : f32
    %30 = vector.broadcast %cst_23 : f32 to vector<32x128xf32>
    %31 = arith.maximumf %29, %30 : vector<32x128xf32>
    %32 = arith.truncf %31 : vector<32x128xf32> to vector<32x128xbf16>
    %c0_24 = arith.constant 0 : index
    %c0_25 = arith.constant 0 : index
    %33 = vector.load %arg10[%c0_24, %c0_25] : memref<1x32xbf16, #tpu.memory_space<vmem>>, vector<1x32xbf16>
    %cst_26 = arith.constant dense<0.000000e+00> : vector<1x128xf32>
    %34 = tpu.matmul %33, %32, %cst_26 {dimension_numbers = #tpu.dot_dimension_numbers<[1], [0], [0], [1], [0, 0, 1, 1], [], []>} : vector<1x32xbf16>, vector<32x128xbf16>, vector<1x128xf32> -> vector<1x128xf32>
    %c0_27 = arith.constant 0 : index
    %c0_28 = arith.constant 0 : index
    %35 = vector.load %arg11[%c0_27, %c0_28] : memref<1x1xf32, #tpu.memory_space<vmem>>, vector<1x1xf32>
    %36 = vector.broadcast %35 : vector<1x1xf32> to vector<1x128xf32>
    %37 = arith.addf %34, %36 : vector<1x128xf32>
    %c0_29 = arith.constant 0 : index
    %c0_30 = arith.constant 0 : index
    %38 = vector.load %arg12[%c0_29, %c0_30] : memref<1x128xf32, #tpu.memory_space<vmem>>, vector<1x128xf32>
    tpu.vector_store %arg12[%c0_29, %c0_30], %37 {strides = array<i32>} : memref<1x128xf32, #tpu.memory_space<vmem>>, vector<1x128xf32>,
    return
  }
  func.func @transform_0(%arg0: i32) -> (i32, i32) {
    %c0_i32 = arith.constant 0 : i32
    %c0_i32_0 = arith.constant 0 : i32
    return %c0_i32, %arg0 : i32, i32
  }
  func.func @transform_1(%arg0: i32) -> (i32, i32) {
    %c0_i32 = arith.constant 0 : i32
    %c0_i32_0 = arith.constant 0 : i32
    %c0_i32_1 = arith.constant 0 : i32
    return %c0_i32, %c0_i32_0 : i32, i32
  }
  func.func @transform_2(%arg0: i32) -> (i32, i32) {
    %c0_i32 = arith.constant 0 : i32
    %c0_i32_0 = arith.constant 0 : i32
    %c0_i32_1 = arith.constant 0 : i32
    return %c0_i32, %c0_i32_0 : i32, i32
  }
  func.func @transform_3(%arg0: i32) -> (i32, i32) {
    %c0_i32 = arith.constant 0 : i32
    %c0_i32_0 = arith.constant 0 : i32
    %c0_i32_1 = arith.constant 0 : i32
    return %c0_i32, %c0_i32_0 : i32, i32
  }
  func.func @transform_4(%arg0: i32) -> (i32, i32) {
    %c0_i32 = arith.constant 0 : i32
    %c0_i32_0 = arith.constant 0 : i32
    %c0_i32_1 = arith.constant 0 : i32
    return %c0_i32, %c0_i32_0 : i32, i32
  }
  func.func @transform_5(%arg0: i32) -> (i32, i32) {
    %c0_i32 = arith.constant 0 : i32
    %c0_i32_0 = arith.constant 0 : i32
    %c0_i32_1 = arith.constant 0 : i32
    return %c0_i32, %c0_i32_0 : i32, i32
  }
  func.func @transform_6(%arg0: i32) -> (i32, i32) {
    %c0_i32 = arith.constant 0 : i32
    %c0_i32_0 = arith.constant 0 : i32
    %c0_i32_1 = arith.constant 0 : i32
    return %c0_i32, %c0_i32_0 : i32, i32
  }
  func.func @transform_7(%arg0: i32) -> (i32, i32) {
    %c0_i32 = arith.constant 0 : i32
    %c0_i32_0 = arith.constant 0 : i32
    %c0_i32_1 = arith.constant 0 : i32
    return %c0_i32, %c0_i32_0 : i32, i32
  }
  func.func @transform_8(%arg0: i32) -> (i32, i32) {
    %c0_i32 = arith.constant 0 : i32
    %c0_i32_0 = arith.constant 0 : i32
    %c0_i32_1 = arith.constant 0 : i32
    return %c0_i32, %c0_i32_0 : i32, i32
  }
  func.func @transform_9(%arg0: i32) -> (i32, i32) {
    %c0_i32 = arith.constant 0 : i32
    %c0_i32_0 = arith.constant 0 : i32
    %c0_i32_1 = arith.constant 0 : i32
    return %c0_i32, %c0_i32_0 : i32, i32
  }
  func.func @transform_10(%arg0: i32) -> (i32, i32) {
    %c0_i32 = arith.constant 0 : i32
    %c0_i32_0 = arith.constant 0 : i32
    %c0_i32_1 = arith.constant 0 : i32
    return %c0_i32, %c0_i32_0 : i32, i32
  }
  func.func @transform_11(%arg0: i32) -> (i32, i32) {
    %c0_i32 = arith.constant 0 : i32
    %c0_i32_0 = arith.constant 0 : i32
    return %c0_i32, %arg0 : i32, i32
  }
}

</mosaic_0001>

<llo_original>
// kernel: tpu_custom_call.1
$region0: #{tpu_custom_call.1}
  #allocation0 [shape = 'u32[]', space=smem, size = 0x4, offset = 0x4, fixed_abs, tag = 'smem constant byte address 0x4 - core index']
  #allocation1 [shape = 'u32[144,128]{1,0:T(1,128)}', space=vmem, size = 0x12000, scoped, tag = 'internal scratch']
  #allocation2 [shape = 'f32[1,1]{1,0:T(1,128)S(1)}', space=vmem, size = 0x200, scoped, tag = 'scoped memory for tpu_custom_call.1']
  %s0 = inlined_call_operand.vmem [shape: bf16[32,384], index: 0, kind: input, shape index: {}]
  %s1 = inlined_call_operand.vmem [shape: bf16[32,32], index: 1, kind: input, shape index: {}]
  %s2 = inlined_call_operand.vmem [shape: f32[32,1], index: 2, kind: input, shape index: {}]
  %s3 = inlined_call_operand.vmem [shape: bf16[32,32], index: 3, kind: input, shape index: {}]
  %s4 = inlined_call_operand.vmem [shape: f32[32,1], index: 4, kind: input, shape index: {}]
  %s5 = inlined_call_operand.vmem [shape: bf16[32,32], index: 5, kind: input, shape index: {}]
  %s6 = inlined_call_operand.vmem [shape: f32[32,1], index: 6, kind: input, shape index: {}]
  %s7 = inlined_call_operand.vmem [shape: bf16[32,32], index: 7, kind: input, shape index: {}]
  %s8 = inlined_call_operand.vmem [shape: f32[32,1], index: 8, kind: input, shape index: {}]
  %s9 = inlined_call_operand.vmem [shape: bf16[1,32], index: 9, kind: input, shape index: {}]
  %s10 = inlined_call_operand.<no memory space> [shape: f32[1,1], index: 10, kind: input, shape index: {}]
  %s11 = inlined_call_operand.hbm [shape: f32[1,384], index: 11, kind: output, shape index: {}]
  %s12 = sld [smem:[#allocation0]]
  $region118: #{tpu_custom_call.1} parent=0
    _
  %s14 = ssub.s32 1, %s12
  %s15 = scalar_select 0, %s14, %s12
  %v16 = vstv %s10
  %17 = vst [vmem:[#allocation2] sm:$0x1] %v16
  $region1: #{tpu_custom_call.1} parent=0
    #allocation3 [shape = 'u8[16384]{0}', space=vmem, size = 0x4000, scoped, tag = 'input window, operand 0']
    #allocation4 [shape = 'u8[1024]{0}', space=vmem, size = 0x400, scoped, tag = 'output window, operand 0']
    #allocation5 [shape = 's32[2]{0}', space=sflag, size = 0x8, scoped, tag = 'scoped memory for tpu_custom_call.1']
    %18 = vsyncpa [#allocation5], 0
    %s19 = scalar_lea.sflag [#allocation5], 1
    %20 = vsyncpa %s19, 0
    loop: start=0, step=1, limit=5
    $region2: #{tpu_custom_call.1} parent=1 // loop_pre_header
      _
    $region3: #{tpu_custom_call.1} parent=1 // loop_header
      %s22 = sphi 0, %s26
      %p23 = scmp.ge.s32.totalorder %s22, 5
      %s32 = sphi 0, %s34
      %s35 = sphi 0, %s32
      %s36 = sphi 0, %s35
      %s52 = sphi 0, %s36
      %s56 = sphi 0, %s56
      %s58 = sphi 0, %s56
      %s59 = sphi 0, %s58
      %s73 = sphi 0, %s59
      %s77 = sphi 0, %s77
      %s79 = sphi 0, %s77
      %s80 = sphi 0, %s79
      %s94 = sphi 0, %s80
      %s98 = sphi 0, %s98
      %s100 = sphi 0, %s98
      %s101 = sphi 0, %s100
      %s115 = sphi 0, %s101
      %s119 = sphi 0, %s119
      %s121 = sphi 0, %s119
      %s122 = sphi 0, %s121
      %s136 = sphi 0, %s122
      %s140 = sphi 0, %s140
      %s142 = sphi 0, %s140
      %s143 = sphi 0, %s142
      %s157 = sphi 0, %s143
      %s161 = sphi 0, %s161
      %s163 = sphi 0, %s161
      %s164 = sphi 0, %s163
      %s178 = sphi 0, %s164
      %s182 = sphi 0, %s182
      %s184 = sphi 0, %s182
      %s185 = sphi 0, %s184
      %s199 = sphi 0, %s185
      %s203 = sphi 0, %s203
      %s205 = sphi 0, %s203
      %s206 = sphi 0, %s205
      %s220 = sphi 0, %s206
      %s224 = sphi 0, %s224
      %s226 = sphi 0, %s224
      %s227 = sphi 0, %s226
      %s241 = sphi 0, %s227
      %s245 = sphi 0, %s245
      %s247 = sphi 0, %s245
      %s248 = sphi 0, %s247
      %s262 = sphi 0, %s248
      %s268 = sphi 0, %s270
      %s271 = sphi 0, %s268
      %s272 = sphi 0, %s271
      %s288 = sphi 0, %s272
    $region4: #{tpu_custom_call.1} parent=1 // loop_header_branch
      %25 = sbr.rel (%p23) target = $region8
    $region5: #{tpu_custom_call.1} parent=1 // loop_body
      %s27 = ssub.s32 %s22, 1
      %s28 = ssub.s32 %s22, 2
      %s29 = sadd.s32 %s22, 1
      %s30 = ssub.s32 %s22, %s29
      %p31 = scmp.eq.s32.totalorder %s30, 0
      %s33 = sadd.s32 %s32, 1
      %s34 = scalar_select %p31, %s32, %s33
      %p37 = pneg %p31
      %p38 = scmp.eq.s32.totalorder %s22, 2
      %p39 = por %p37, %p38
      %p40 = scmp.ne.s32.totalorder %s32, %s35
      %p41 = scmp.eq.s32.totalorder %s22, 0
      %p42 = por %p40, %p41
      %p43 = scmp.ne.s32.totalorder %s32, %s35
      %p44 = scmp.eq.s32.totalorder %s27, 2
      %p45 = por %p43, %p44
      %p46 = scmp.ne.s32.totalorder %s35, %s36
      %p47 = scmp.eq.s32.totalorder %s27, 0
      %p48 = por %p46, %p47
      %p49 = scmp.ne.s32.totalorder %s35, %s36
      %p50 = scmp.eq.s32.totalorder %s28, 2
      %p51 = por %p49, %p50
      %p53 = scmp.ne.s32.totalorder %s36, %s52
      %p54 = scmp.eq.s32.totalorder %s28, 0
      %p55 = por %p53, %p54
      %s57 = sadd.s32 %s56, 1
      %p60 = scmp.eq.s32.totalorder %s22, 2
      %p61 = scmp.ne.s32.totalorder %s56, %s58
      %p62 = scmp.eq.s32.totalorder %s22, 0
      %p63 = por %p61, %p62
      %p64 = scmp.ne.s32.totalorder %s56, %s58
      %p65 = scmp.eq.s32.totalorder %s27, 2
      %p66 = por %p64, %p65
      %p67 = scmp.ne.s32.totalorder %s58, %s59
      %p68 = scmp.eq.s32.totalorder %s27, 0
      %p69 = por %p67, %p68
      %p70 = scmp.ne.s32.totalorder %s58, %s59
      %p71 = scmp.eq.s32.totalorder %s28, 2
      %p72 = por %p70, %p71
      %p74 = scmp.ne.s32.totalorder %s59, %s73
      %p75 = scmp.eq.s32.totalorder %s28, 0
      %p76 = por %p74, %p75
      %s78 = sadd.s32 %s77, 1
      %p81 = scmp.eq.s32.totalorder %s22, 2
      %p82 = scmp.ne.s32.totalorder %s77, %s79
      %p83 = scmp.eq.s32.totalorder %s22, 0
      %p84 = por %p82, %p83
      %p85 = scmp.ne.s32.totalorder %s77, %s79
      %p86 = scmp.eq.s32.totalorder %s27, 2
      %p87 = por %p85, %p86
      %p88 = scmp.ne.s32.totalorder %s79, %s80
      %p89 = scmp.eq.s32.totalorder %s27, 0
      %p90 = por %p88, %p89
      %p91 = scmp.ne.s32.totalorder %s79, %s80
      %p92 = scmp.eq.s32.totalorder %s28, 2
      %p93 = por %p91, %p92
      %p95 = scmp.ne.s32.totalorder %s80, %s94
      %p96 = scmp.eq.s32.totalorder %s28, 0
      %p97 = por %p95, %p96
      %s99 = sadd.s32 %s98, 1
      %p102 = scmp.eq.s32.totalorder %s22, 2
      %p103 = scmp.ne.s32.totalorder %s98, %s100
      %p104 = scmp.eq.s32.totalorder %s22, 0
      %p105 = por %p103, %p104
      %p106 = scmp.ne.s32.totalorder %s98, %s100
      %p107 = scmp.eq.s32.totalorder %s27, 2
      %p108 = por %p106, %p107
      %p109 = scmp.ne.s32.totalorder %s100, %s101
      %p110 = scmp.eq.s32.totalorder %s27, 0
      %p111 = por %p109, %p110
      %p112 = scmp.ne.s32.totalorder %s100, %s101
      %p113 = scmp.eq.s32.totalorder %s28, 2
      %p114 = por %p112, %p113
      %p116 = scmp.ne.s32.totalorder %s101, %s115
      %p117 = scmp.eq.s32.totalorder %s28, 0
      %p118 = por %p116, %p117
      %s120 = sadd.s32 %s119, 1
      %p123 = scmp.eq.s32.totalorder %s22, 2
      %p124 = scmp.ne.s32.totalorder %s119, %s121
      %p125 = scmp.eq.s32.totalorder %s22, 0
      %p126 = por %p124, %p125
      %p127 = scmp.ne.s32.totalorder %s119, %s121
      %p128 = scmp.eq.s32.totalorder %s27, 2
      %p129 = por %p127, %p128
      %p130 = scmp.ne.s32.totalorder %s121, %s122
      %p131 = scmp.eq.s32.totalorder %s27, 0
      %p132 = por %p130, %p131
      %p133 = scmp.ne.s32.totalorder %s121, %s122
      %p134 = scmp.eq.s32.totalorder %s28, 2
      %p135 = por %p133, %p134
      %p137 = scmp.ne.s32.totalorder %s122, %s136
      %p138 = scmp.eq.s32.totalorder %s28, 0
      %p139 = por %p137, %p138
      %s141 = sadd.s32 %s140, 1
      %p144 = scmp.eq.s32.totalorder %s22, 2
      %p145 = scmp.ne.s32.totalorder %s140, %s142
      %p146 = scmp.eq.s32.totalorder %s22, 0
      %p147 = por %p145, %p146
      %p148 = scmp.ne.s32.totalorder %s140, %s142
      %p149 = scmp.eq.s32.totalorder %s27, 2
      %p150 = por %p148, %p149
      %p151 = scmp.ne.s32.totalorder %s142, %s143
      %p152 = scmp.eq.s32.totalorder %s27, 0
      %p153 = por %p151, %p152
      %p154 = scmp.ne.s32.totalorder %s142, %s143
      %p155 = scmp.eq.s32.totalorder %s28, 2
      %p156 = por %p154, %p155
      %p158 = scmp.ne.s32.totalorder %s143, %s157
      %p159 = scmp.eq.s32.totalorder %s28, 0
      %p160 = por %p158, %p159
      %s162 = sadd.s32 %s161, 1
      %p165 = scmp.eq.s32.totalorder %s22, 2
      %p166 = scmp.ne.s32.totalorder %s161, %s163
      %p167 = scmp.eq.s32.totalorder %s22, 0
      %p168 = por %p166, %p167
      %p169 = scmp.ne.s32.totalorder %s161, %s163
      %p170 = scmp.eq.s32.totalorder %s27, 2
      %p171 = por %p169, %p170
      %p172 = scmp.ne.s32.totalorder %s163, %s164
      %p173 = scmp.eq.s32.totalorder %s27, 0
      %p174 = por %p172, %p173
      %p175 = scmp.ne.s32.totalorder %s163, %s164
      %p176 = scmp.eq.s32.totalorder %s28, 2
      %p177 = por %p175, %p176
      %p179 = scmp.ne.s32.totalorder %s164, %s178
      %p180 = scmp.eq.s32.totalorder %s28, 0
      %p181 = por %p179, %p180
      %s183 = sadd.s32 %s182, 1
      %p186 = scmp.eq.s32.totalorder %s22, 2
      %p187 = scmp.ne.s32.totalorder %s182, %s184
      %p188 = scmp.eq.s32.totalorder %s22, 0
      %p189 = por %p187, %p188
      %p190 = scmp.ne.s32.totalorder %s182, %s184
      %p191 = scmp.eq.s32.totalorder %s27, 2
      %p192 = por %p190, %p191
      %p193 = scmp.ne.s32.totalorder %s184, %s185
      %p194 = scmp.eq.s32.totalorder %s27, 0
      %p195 = por %p193, %p194
      %p196 = scmp.ne.s32.totalorder %s184, %s185
      %p197 = scmp.eq.s32.totalorder %s28, 2
      %p198 = por %p196, %p197
      %p200 = scmp.ne.s32.totalorder %s185, %s199
      %p201 = scmp.eq.s32.totalorder %s28, 0
      %p202 = por %p200, %p201
      %s204 = sadd.s32 %s203, 1
      %p207 = scmp.eq.s32.totalorder %s22, 2
      %p208 = scmp.ne.s32.totalorder %s203, %s205
      %p209 = scmp.eq.s32.totalorder %s22, 0
      %p210 = por %p208, %p209
      %p211 = scmp.ne.s32.totalorder %s203, %s205
      %p212 = scmp.eq.s32.totalorder %s27, 2
      %p213 = por %p211, %p212
      %p214 = scmp.ne.s32.totalorder %s205, %s206
      %p215 = scmp.eq.s32.totalorder %s27, 0
      %p216 = por %p214, %p215
      %p217 = scmp.ne.s32.totalorder %s205, %s206
      %p218 = scmp.eq.s32.totalorder %s28, 2
      %p219 = por %p217, %p218
      %p221 = scmp.ne.s32.totalorder %s206, %s220
      %p222 = scmp.eq.s32.totalorder %s28, 0
      %p223 = por %p221, %p222
      %s225 = sadd.s32 %s224, 1
      %p228 = scmp.eq.s32.totalorder %s22, 2
      %p229 = scmp.ne.s32.totalorder %s224, %s226
      %p230 = scmp.eq.s32.totalorder %s22, 0
      %p231 = por %p229, %p230
      %p232 = scmp.ne.s32.totalorder %s224, %s226
      %p233 = scmp.eq.s32.totalorder %s27, 2
      %p234 = por %p232, %p233
      %p235 = scmp.ne.s32.totalorder %s226, %s227
      %p236 = scmp.eq.s32.totalorder %s27, 0
      %p237 = por %p235, %p236
      %p238 = scmp.ne.s32.totalorder %s226, %s227
      %p239 = scmp.eq.s32.totalorder %s28, 2
      %p240 = por %p238, %p239
      %p242 = scmp.ne.s32.totalorder %s227, %s241
      %p243 = scmp.eq.s32.totalorder %s28, 0
      %p244 = por %p242, %p243
      %s246 = sadd.s32 %s245, 1
      %p249 = scmp.eq.s32.totalorder %s22, 2
      %p250 = scmp.ne.s32.totalorder %s245, %s247
      %p251 = scmp.eq.s32.totalorder %s22, 0
      %p252 = por %p250, %p251
      %p253 = scmp.ne.s32.totalorder %s245, %s247
      %p254 = scmp.eq.s32.totalorder %s27, 2
      %p255 = por %p253, %p254
      %p256 = scmp.ne.s32.totalorder %s247, %s248
      %p257 = scmp.eq.s32.totalorder %s27, 0
      %p258 = por %p256, %p257
      %p259 = scmp.ne.s32.totalorder %s247, %s248
      %p260 = scmp.eq.s32.totalorder %s28, 2
      %p261 = por %p259, %p260
      %p263 = scmp.ne.s32.totalorder %s248, %s262
      %p264 = scmp.eq.s32.totalorder %s28, 0
      %p265 = por %p263, %p264
      %s266 = ssub.s32 %s22, %s29
      %p267 = scmp.eq.s32.totalorder %s266, 0
      %s269 = sadd.s32 %s268, 1
      %s270 = scalar_select %p267, %s268, %s269
      %p273 = pneg %p267
      %p274 = scmp.eq.s32.totalorder %s22, 2
      %p275 = por %p273, %p274
      %p276 = scmp.ne.s32.totalorder %s268, %s271
      %p277 = scmp.eq.s32.totalorder %s22, 0
      %p278 = por %p276, %p277
      %p279 = scmp.ne.s32.totalorder %s268, %s271
      %p280 = scmp.eq.s32.totalorder %s27, 2
      %p281 = por %p279, %p280
      %p282 = scmp.ne.s32.totalorder %s271, %s272
      %p283 = scmp.eq.s32.totalorder %s27, 0
      %p284 = por %p282, %p283
      %p285 = scmp.ne.s32.totalorder %s271, %s272
      %p286 = scmp.eq.s32.totalorder %s28, 2
      %p287 = por %p285, %p286
      %p289 = scmp.ne.s32.totalorder %s272, %s288
      %p290 = scmp.eq.s32.totalorder %s28, 0
      %p291 = por %p289, %p290
      %p292 = scmp.le.s32.totalorder 1, %s22
      %p293 = scmp.lt.s32.totalorder %s22, 4
      %p294 = pnand %p292, %p293
      %p295 = pneg %p294
      // Predicated region
      $region9: #{tpu_custom_call.1} parent=5 // pred_check
        _
      $region10: #{tpu_custom_call.1} parent=5 // pred_check_branch
        %297 = sbr.rel (%p294) target = $region12
      $region11: #{tpu_custom_call.1} parent=5 // pred_region
        %s298 = ssub.s32 %s22, 1
        // Predicated region
        $region13: #{tpu_custom_call.1} parent=11 // pred_check
          %p299 = pneg %p69
        $region14: #{tpu_custom_call.1} parent=11 // pred_check_branch
          %301 = sbr.rel (%p299) target = $region16
        $region15: #{tpu_custom_call.1} parent=11 // pred_region
          _
        $region16: #{tpu_custom_call.1} parent=11 // pred_fallthru
          _
        // Predicated region
        $region17: #{tpu_custom_call.1} parent=11 // pred_check
          %p302 = pneg %p90
        $region18: #{tpu_custom_call.1} parent=11 // pred_check_branch
          %304 = sbr.rel (%p302) target = $region20
        $region19: #{tpu_custom_call.1} parent=11 // pred_region
          _
        $region20: #{tpu_custom_call.1} parent=11 // pred_fallthru
          _
        // Predicated region
        $region21: #{tpu_custom_call.1} parent=11 // pred_check
          %p305 = pneg %p111
        $region22: #{tpu_custom_call.1} parent=11 // pred_check_branch
          %307 = sbr.rel (%p305) target = $region24
        $region23: #{tpu_custom_call.1} parent=11 // pred_region
          _
        $region24: #{tpu_custom_call.1} parent=11 // pred_fallthru
          _
        // Predicated region
        $region25: #{tpu_custom_call.1} parent=11 // pred_check
          %p308 = pneg %p132
        $region26: #{tpu_custom_call.1} parent=11 // pred_check_branch
          %310 = sbr.rel (%p308) target = $region28
        $region27: #{tpu_custom_call.1} parent=11 // pred_region
          _
        $region28: #{tpu_custom_call.1} parent=11 // pred_fallthru
          _
        // Predicated region
        $region29: #{tpu_custom_call.1} parent=11 // pred_check
          %p311 = pneg %p153
        $region30: #{tpu_custom_call.1} parent=11 // pred_check_branch
          %313 = sbr.rel (%p311) target = $region32
        $region31: #{tpu_custom_call.1} parent=11 // pred_region
          _
        $region32: #{tpu_custom_call.1} parent=11 // pred_fallthru
          _
        // Predicated region
        $region33: #{tpu_custom_call.1} parent=11 // pred_check
          %p314 = pneg %p174
        $region34: #{tpu_custom_call.1} parent=11 // pred_check_branch
          %316 = sbr.rel (%p314) target = $region36
        $region35: #{tpu_custom_call.1} parent=11 // pred_region
          _
        $region36: #{tpu_custom_call.1} parent=11 // pred_fallthru
          _
        // Predicated region
        $region37: #{tpu_custom_call.1} parent=11 // pred_check
          %p317 = pneg %p195
        $region38: #{tpu_custom_call.1} parent=11 // pred_check_branch
          %319 = sbr.rel (%p317) target = $region40
        $region39: #{tpu_custom_call.1} parent=11 // pred_region
          _
        $region40: #{tpu_custom_call.1} parent=11 // pred_fallthru
          _
        // Predicated region
        $region41: #{tpu_custom_call.1} parent=11 // pred_check
          %p320 = pneg %p216
        $region42: #{tpu_custom_call.1} parent=11 // pred_check_branch
          %322 = sbr.rel (%p320) target = $region44
        $region43: #{tpu_custom_call.1} parent=11 // pred_region
          _
        $region44: #{tpu_custom_call.1} parent=11 // pred_fallthru
          _
        // Predicated region
        $region45: #{tpu_custom_call.1} parent=11 // pred_check
          %p323 = pneg %p237
        $region46: #{tpu_custom_call.1} parent=11 // pred_check_branch
          %325 = sbr.rel (%p323) target = $region48
        $region47: #{tpu_custom_call.1} parent=11 // pred_region
          _
        $region48: #{tpu_custom_call.1} parent=11 // pred_fallthru
          _
        // Predicated region
        $region49: #{tpu_custom_call.1} parent=11 // pred_check
          %p326 = pneg %p258
        $region50: #{tpu_custom_call.1} parent=11 // pred_check_branch
          %328 = sbr.rel (%p326) target = $region52
        $region51: #{tpu_custom_call.1} parent=11 // pred_region
          _
        $region52: #{tpu_custom_call.1} parent=11 // pred_fallthru
          _
      $region12: #{tpu_custom_call.1} parent=5 // pred_fallthru
        _
      %p329 = scmp.lt.s32.totalorder %s22, 3
      // Predicated region
      $region53: #{tpu_custom_call.1} parent=5 // pred_check
        %p330 = pneg %p329
      $region54: #{tpu_custom_call.1} parent=5 // pred_check_branch
        %332 = sbr.rel (%p330) target = $region56
      $region55: #{tpu_custom_call.1} parent=5 // pred_region
        // Predicated region
        $region57: #{tpu_custom_call.1} parent=55 // pred_check
          %p333 = pneg %p42
        $region58: #{tpu_custom_call.1} parent=55 // pred_check_branch
          %335 = sbr.rel (%p333) target = $region60
        $region59: #{tpu_custom_call.1} parent=55 // pred_region
          %s336 = sand.u32 %s32, 1
          %s337 = sand.u32 %s32, 1
          %s338 = smul.addr %s337, 16
          %s339 = scalar_lea.vmem [#allocation3], %s338
          %s340 = smul.addr %s22, 4
          %s341 = scalar_lea.vmem %s0, %s340
          // Predicated region
          $region61: #{tpu_custom_call.1} parent=59 // pred_check
            _
          $region62: #{tpu_custom_call.1} parent=59 // pred_check_branch
            %343 = sbr.rel (0) target = $region64
          $region63: #{tpu_custom_call.1} parent=59 // pred_region
            // Predicated region
            $region65: #{tpu_custom_call.1} parent=63 // pred_check
              _
            $region66: #{tpu_custom_call.1} parent=63 // pred_check_branch
              %345 = sbr.rel target = $region68
            $region67: #{tpu_custom_call.1} parent=63 // pred_region
              // Predicated region
              $region80: #{tpu_custom_call.1} parent=67 // pred_check
                _
              $region81: #{tpu_custom_call.1} parent=67 // pred_check_branch
                %366 = sbr.rel (0) target = $region83
              $region82: #{tpu_custom_call.1} parent=67 // pred_region
                loop: start=0, step=1, limit=1
                $region84: #{tpu_custom_call.1} parent=82 // loop_pre_header
                  _
                $region85: #{tpu_custom_call.1} parent=82 // loop_header
                  %s368 = sphi 0, %s372
                  %p369 = scmp.ge.s32.totalorder %s368, 1
                  %s373 = sphi %s341, %s341
                  %s374 = sphi %s339, %s339
                $region86: #{tpu_custom_call.1} parent=82 // loop_header_branch
                  %371 = sbr.rel (%p369) target = $region90
                $region87: #{tpu_custom_call.1} parent=82 // loop_body
                  _
                $region88: #{tpu_custom_call.1} parent=82 // loop_footer
                  %s372 = sadd.s32 1, %s368
                $region89: #{tpu_custom_call.1} parent=82 // loop_footer_branch
                  %367 = sbr.rel target = $region85
                $region90: #{tpu_custom_call.1} parent=82 // loop_exit
                  _
                loop: start=0, step=1, limit=1
                $region91: #{tpu_custom_call.1} parent=82 // loop_pre_header
                  _
                $region92: #{tpu_custom_call.1} parent=82 // loop_header
                  %s377 = sphi 0, %s381
                  %p378 = scmp.ge.s32.totalorder %s377, 1
                  %s382 = sphi %s341, %s341
                  %s383 = sphi %s339, %s339
                $region93: #{tpu_custom_call.1} parent=82 // loop_header_branch
                  %380 = sbr.rel (%p378) target = $region97
                $region94: #{tpu_custom_call.1} parent=82 // loop_body
                  %v384 = vld [vmem:[%s382] sm:$0xf]
                  %385 = vst [vmem:[%s383] sm:$0xf] %v384
                  %v386 = vld [vmem:[%s382 + $0xc] sm:$0xf]
                  %387 = vst [vmem:[%s383 + $0x4] sm:$0xf] %v386
                  %v388 = vld [vmem:[%s382 + $0x18] sm:$0xf]
                  %389 = vst [vmem:[%s383 + $0x8] sm:$0xf] %v388
                  %v390 = vld [vmem:[%s382 + $0x24] sm:$0xf]
                  %391 = vst [vmem:[%s383 + $0xc] sm:$0xf] %v390
                $region95: #{tpu_custom_call.1} parent=82 // loop_footer
                  %s381 = sadd.s32 1, %s377
                $region96: #{tpu_custom_call.1} parent=82 // loop_footer_branch
                  %376 = sbr.rel target = $region92
                $region97: #{tpu_custom_call.1} parent=82 // loop_exit
                  _
              $region83: #{tpu_custom_call.1} parent=67 // pred_fallthru
                _
            $region68: #{tpu_custom_call.1} parent=63 // pred_fallthru
              _
            // Predicated region
            $region69: #{tpu_custom_call.1} parent=63 // pred_check
              _
            $region70: #{tpu_custom_call.1} parent=63 // pred_check_branch
              %347 = sbr.rel (0) target = $region72
            $region71: #{tpu_custom_call.1} parent=63 // pred_region
              loop: start=0, step=1, limit=1
              $region73: #{tpu_custom_call.1} parent=71 // loop_pre_header
                _
              $region74: #{tpu_custom_call.1} parent=71 // loop_header
                %s350 = sphi 0, %s354
                %p351 = scmp.ge.s32.totalorder %s350, 1
                %s355 = sphi %s341, %s341
                %s356 = sphi %s339, %s339
              $region75: #{tpu_custom_call.1} parent=71 // loop_header_branch
                %353 = sbr.rel (%p351) target = $region79
              $region76: #{tpu_custom_call.1} parent=71 // loop_body
                %v357 = vld [vmem:[%s355] sm:$0xf]
                %358 = vst [vmem:[%s356] sm:$0xf] %v357
                %v359 = vld [vmem:[%s355 + $0xc] sm:$0xf]
                %360 = vst [vmem:[%s356 + $0x4] sm:$0xf] %v359
                %v361 = vld [vmem:[%s355 + $0x18] sm:$0xf]
                %362 = vst [vmem:[%s356 + $0x8] sm:$0xf] %v361
                %v363 = vld [vmem:[%s355 + $0x24] sm:$0xf]
                %364 = vst [vmem:[%s356 + $0xc] sm:$0xf] %v363
              $region77: #{tpu_custom_call.1} parent=71 // loop_footer
                %s354 = sadd.s32 1, %s350
              $region78: #{tpu_custom_call.1} parent=71 // loop_footer_branch
                %349 = sbr.rel target = $region74
              $region79: #{tpu_custom_call.1} parent=71 // loop_exit
                _
            $region72: #{tpu_custom_call.1} parent=63 // pred_fallthru
              _
          $region64: #{tpu_custom_call.1} parent=59 // pred_fallthru
            _
          %392 = vnop
        $region60: #{tpu_custom_call.1} parent=55 // pred_fallthru
          _
      $region56: #{tpu_custom_call.1} parent=5 // pred_fallthru
        _
      %p393 = scmp.le.s32.totalorder 1, %s22
      %p394 = scmp.lt.s32.totalorder %s22, 4
      %p395 = pnand %p393, %p394
      %p396 = pneg %p395
      // Predicated region
      $region98: #{tpu_custom_call.1} parent=5 // pred_check
        _
      $region99: #{tpu_custom_call.1} parent=5 // pred_check_branch
        %398 = sbr.rel (%p395) target = $region101
      $region100: #{tpu_custom_call.1} parent=5 // pred_region
        %s399 = ssub.s32 %s22, 1
        %s400 = sand.u32 %s35, 1
        %s401 = sand.u32 %s35, 1
        %s402 = smul.addr %s401, 16
        %s403 = scalar_lea.vmem [#allocation3], %s402
        // Predicated region
        $region102: #{tpu_custom_call.1} parent=100 // pred_check
          %p404 = pneg %p48
        $region103: #{tpu_custom_call.1} parent=100 // pred_check_branch
          %406 = sbr.rel (%p404) target = $region105
        $region104: #{tpu_custom_call.1} parent=100 // pred_region
          _
        $region105: #{tpu_custom_call.1} parent=100 // pred_fallthru
          _
        %s407 = sand.u32 %s35, 1
        %s408 = sand.u32 %s35, 1
        %s409 = smul.addr %s408, 16
        %s410 = scalar_lea.vmem [#allocation3], %s409
        %p411 = pneg %p48
        %p412 = pneg %p45
        %p413 = pneg %p69
        %p414 = pneg %p66
        %p415 = pneg %p90
        %p416 = pneg %p87
        %p417 = pneg %p111
        %p418 = pneg %p108
        %p419 = pneg %p132
        %p420 = pneg %p129
        %p421 = pneg %p153
        %p422 = pneg %p150
        %p423 = pneg %p174
        %p424 = pneg %p171
        %p425 = pneg %p195
        %p426 = pneg %p192
        %p427 = pneg %p216
        %p428 = pneg %p213
        %p429 = pneg %p237
        %p430 = pneg %p234
        %p431 = pneg %p258
        %p432 = pneg %p255
        %p433 = pneg %p284
        %p434 = pneg %p281
        %s435 = sand.u32 %s271, 1
        %s436 = scalar_lea.sflag [#allocation5], %s435
        %s437 = sand.u32 %s271, 1
        %s438 = scalar_lea.vmem [#allocation4], %s437
        %v440 = vld [vmem:[%s403] sm:$0xf]
        %v441 = vld [vmem:[%s403 + $0x4] sm:$0xf]
        %v442 = vld [vmem:[%s403 + $0x8] sm:$0xf]
        %v443 = vld [vmem:[%s403 + $0xc] sm:$0xf]
        %v444 = vld [vmem:[%s1] sm:$0xf]
        %v445 = vld [vmem:[%s1 + $0x4] sm:$0xf]
        %v446 = vld [vmem:[%s1 + $0x8] sm:$0xf]
        %v447 = vld [vmem:[%s1 + $0xc] sm:$0xf]
        %v448 = vld [vmem:[%s2] sm:$0xff]
        %v449 = vld [vmem:[%s2 + $0x8] sm:$0xff]
        %v450 = vld [vmem:[%s2 + $0x10] sm:$0xff]
        %v451 = vld [vmem:[%s2 + $0x18] sm:$0xff]
        %453 = vset.pattern.permute.xlu0 0
        %454 = vperm.xlu0 %453, %v448
        %v455 = vpop.permute.xlu0 %454
        %458 = vset.pattern.permute.xlu0 0
        %459 = vperm.xlu0 %458, %v449
        %v460 = vpop.permute.xlu0 %459
        %463 = vset.pattern.permute.xlu0 0
        %464 = vperm.xlu0 %463, %v450
        %v465 = vpop.permute.xlu0 %464
        %468 = vset.pattern.permute.xlu0 0
        %469 = vperm.xlu0 %468, %v451
        %v470 = vpop.permute.xlu0 %469
        %v476 = vunpack.c.l.b16 %v444
        %v477 = vunpack.c.l.b16 %v445
        %v478 = vunpack.c.l.b16 %v446
        %v479 = vunpack.c.l.b16 %v447
        %v480 = vpack.c.b16 %v477, %v476
        %v481 = vpack.c.b16 %v479, %v478
        %v486 = vunpack.c.l.b16 %v440
        %v487 = vunpack.c.l.b16 %v441
        %v488 = vunpack.c.l.b16 %v442
        %v489 = vunpack.c.l.b16 %v443
        %v490 = vpack.c.b16 %v487, %v486
        %v491 = vpack.c.b16 %v489, %v488
        %vm494 = vcmask 261120
        %v496 = vsel %vm494, %v480, 0
        %v499 = vsel %vm494, %v481, 0
        %501 = vmatprep.subr.bf16.mxu0 0
        %502 = vmatpush1.bf16.msra.mxu0 %v490
        %503 = vmatprep.subr.bf16.mxu0 0
        %504 = vmatpush1.bf16.msra.mxu0 %v491
        %505 = vmatprep.subr.bf16.mxu0 0
        %506 = vmatpush1.bf16.msra.mxu0 0
        %507 = vmatprep.subr.bf16.mxu0 0
        %508 = vmatpush1.bf16.msra.mxu0 0
        %509 = vmatprep.subr.bf16.mxu0 0
        %510 = vmatpush1.bf16.msra.mxu0 0
        %511 = vmatprep.subr.bf16.mxu0 0
        %512 = vmatpush1.bf16.msra.mxu0 0
        %513 = vmatprep.subr.bf16.mxu0 0
        %514 = vmatpush1.bf16.msra.mxu0 0
        %515 = vmatprep.subr.bf16.mxu0 0
        %516 = vmatpush1.bf16.msra.mxu0 0
        %517 = vmatprep.subr.bf16.mxu0 0
        %518 = vmatpush1.bf16.msra.mxu0 0
        %519 = vmatprep.subr.bf16.mxu0 0
        %520 = vmatpush1.bf16.msra.mxu0 0
        %521 = vmatprep.subr.bf16.mxu0 0
        %522 = vmatpush1.bf16.msra.mxu0 0
        %523 = vmatprep.subr.bf16.mxu0 0
        %524 = vmatpush1.bf16.msra.mxu0 0
        %525 = vmatprep.subr.bf16.mxu0 0
        %526 = vmatpush1.bf16.msra.mxu0 0
        %527 = vmatprep.subr.bf16.mxu0 0
        %528 = vmatpush1.bf16.msra.mxu0 0
        %529 = vmatprep.subr.bf16.mxu0 0
        %530 = vmatpush1.bf16.msra.mxu0 0
        %531 = vmatprep.subr.bf16.mxu0 0
        %532 = vmatpush1.bf16.msra.mxu0 0
        %533 = vmatprep.mubr.bf16.mxu0 0
        %534 = vmatmul.mubr.bf16.gmra.mrb[0].mxu0 %v496
        %v535 = vpop.f32.mrb[0].mxu0
        %v536 = vadd.f32 %v455, %v535
        %v537 = vpop.f32.mrb[0].mxu0
        %v538 = vpop.f32.mrb[0].mxu0
        %v539 = vadd.f32 %v460, %v538
        %v540 = vpop.f32.mrb[0].mxu0
        %541 = vmatprep.mubr.bf16.mxu0 0
        %542 = vmatmul.mubr.bf16.gmra.mrb[0].mxu0 %v499
        %v543 = vpop.f32.mrb[0].mxu0
        %v544 = vadd.f32 %v465, %v543
        %v545 = vpop.f32.mrb[0].mxu0
        %v546 = vpop.f32.mrb[0].mxu0
        %v547 = vadd.f32 %v470, %v546
        %v548 = vpop.f32.mrb[0].mxu0
        %549 = vdwg.mxu0
        %v550 = vmax.f32 %v536, 0.0
        %v551 = vmax.f32 %v539, 0.0
        %v552 = vmax.f32 %v544, 0.0
        %v553 = vmax.f32 %v547, 0.0
        %v554 = vpack.c.bf16 %v551, %v550
        %v555 = vpack.c.bf16 %v553, %v552
        %v556 = vld [vmem:[%s3] sm:$0xf]
        %v557 = vld [vmem:[%s3 + $0x4] sm:$0xf]
        %v558 = vld [vmem:[%s3 + $0x8] sm:$0xf]
        %v559 = vld [vmem:[%s3 + $0xc] sm:$0xf]
        %v560 = vld [vmem:[%s4] sm:$0xff]
        %v561 = vld [vmem:[%s4 + $0x8] sm:$0xff]
        %v562 = vld [vmem:[%s4 + $0x10] sm:$0xff]
        %v563 = vld [vmem:[%s4 + $0x18] sm:$0xff]
        %565 = vset.pattern.permute.xlu0 0
        %566 = vperm.xlu0 %565, %v560
        %v567 = vpop.permute.xlu0 %566
        %570 = vset.pattern.permute.xlu0 0
        %571 = vperm.xlu0 %570, %v561
        %v572 = vpop.permute.xlu0 %571
        %575 = vset.pattern.permute.xlu0 0
        %576 = vperm.xlu0 %575, %v562
        %v577 = vpop.permute.xlu0 %576
        %580 = vset.pattern.permute.xlu0 0
        %581 = vperm.xlu0 %580, %v563
        %v582 = vpop.permute.xlu0 %581
        %v588 = vunpack.c.l.b16 %v556
        %v589 = vunpack.c.l.b16 %v557
        %v590 = vunpack.c.l.b16 %v558
        %v591 = vunpack.c.l.b16 %v559
        %v592 = vpack.c.b16 %v589, %v588
        %v593 = vpack.c.b16 %v591, %v590
        %v595 = vsel %vm494, %v592, 0
        %v598 = vsel %vm494, %v593, 0
        %600 = vmatprep.subr.bf16.mxu0 0
        %601 = vmatpush1.bf16.msra.mxu0 %v554
        %602 = vmatprep.subr.bf16.mxu0 0
        %603 = vmatpush1.bf16.msra.mxu0 %v555
        %604 = vmatprep.subr.bf16.mxu0 0
        %605 = vmatpush1.bf16.msra.mxu0 0
        %606 = vmatprep.subr.bf16.mxu0 0
        %607 = vmatpush1.bf16.msra.mxu0 0
        %608 = vmatprep.subr.bf16.mxu0 0
        %609 = vmatpush1.bf16.msra.mxu0 0
        %610 = vmatprep.subr.bf16.mxu0 0
        %611 = vmatpush1.bf16.msra.mxu0 0
        %612 = vmatprep.subr.bf16.mxu0 0
        %613 = vmatpush1.bf16.msra.mxu0 0
        %614 = vmatprep.subr.bf16.mxu0 0
        %615 = vmatpush1.bf16.msra.mxu0 0
        %616 = vmatprep.subr.bf16.mxu0 0
        %617 = vmatpush1.bf16.msra.mxu0 0
        %618 = vmatprep.subr.bf16.mxu0 0
        %619 = vmatpush1.bf16.msra.mxu0 0
        %620 = vmatprep.subr.bf16.mxu0 0
        %621 = vmatpush1.bf16.msra.mxu0 0
        %622 = vmatprep.subr.bf16.mxu0 0
        %623 = vmatpush1.bf16.msra.mxu0 0
        %624 = vmatprep.subr.bf16.mxu0 0
        %625 = vmatpush1.bf16.msra.mxu0 0
        %626 = vmatprep.subr.bf16.mxu0 0
        %627 = vmatpush1.bf16.msra.mxu0 0
        %628 = vmatprep.subr.bf16.mxu0 0
        %629 = vmatpush1.bf16.msra.mxu0 0
        %630 = vmatprep.subr.bf16.mxu0 0
        %631 = vmatpush1.bf16.msra.mxu0 0
        %632 = vmatprep.mubr.bf16.mxu0 0
        %633 = vmatmul.mubr.bf16.gmra.mrb[0].mxu0 %v595
        %v634 = vpop.f32.mrb[0].mxu0
        %v635 = vadd.f32 %v567, %v634
        %v636 = vpop.f32.mrb[0].mxu0
        %v637 = vpop.f32.mrb[0].mxu0
        %v638 = vadd.f32 %v572, %v637
        %v639 = vpop.f32.mrb[0].mxu0
        %640 = vmatprep.mubr.bf16.mxu0 0
        %641 = vmatmul.mubr.bf16.gmra.mrb[0].mxu0 %v598
        %v642 = vpop.f32.mrb[0].mxu0
        %v643 = vadd.f32 %v577, %v642
        %v644 = vpop.f32.mrb[0].mxu0
        %v645 = vpop.f32.mrb[0].mxu0
        %v646 = vadd.f32 %v582, %v645
        %v647 = vpop.f32.mrb[0].mxu0
        %648 = vdwg.mxu0
        %v649 = vmax.f32 %v635, 0.0
        %v650 = vmax.f32 %v638, 0.0
        %v651 = vmax.f32 %v643, 0.0
        %v652 = vmax.f32 %v646, 0.0
        %v653 = vpack.c.bf16 %v650, %v649
        %v654 = vpack.c.bf16 %v652, %v651
        %v655 = vld [vmem:[%s5] sm:$0xf]
        %v656 = vld [vmem:[%s5 + $0x4] sm:$0xf]
        %v657 = vld [vmem:[%s5 + $0x8] sm:$0xf]
        %v658 = vld [vmem:[%s5 + $0xc] sm:$0xf]
        %v659 = vld [vmem:[%s6] sm:$0xff]
        %v660 = vld [vmem:[%s6 + $0x8] sm:$0xff]
        %v661 = vld [vmem:[%s6 + $0x10] sm:$0xff]
        %v662 = vld [vmem:[%s6 + $0x18] sm:$0xff]
        %664 = vset.pattern.permute.xlu0 0
        %665 = vperm.xlu0 %664, %v659
        %v666 = vpop.permute.xlu0 %665
        %669 = vset.pattern.permute.xlu0 0
        %670 = vperm.xlu0 %669, %v660
        %v671 = vpop.permute.xlu0 %670
        %674 = vset.pattern.permute.xlu0 0
        %675 = vperm.xlu0 %674, %v661
        %v676 = vpop.permute.xlu0 %675
        %679 = vset.pattern.permute.xlu0 0
        %680 = vperm.xlu0 %679, %v662
        %v681 = vpop.permute.xlu0 %680
        %v687 = vunpack.c.l.b16 %v655
        %v688 = vunpack.c.l.b16 %v656
        %v689 = vunpack.c.l.b16 %v657
        %v690 = vunpack.c.l.b16 %v658
        %v691 = vpack.c.b16 %v688, %v687
        %v692 = vpack.c.b16 %v690, %v689
        %v694 = vsel %vm494, %v691, 0
        %v697 = vsel %vm494, %v692, 0
        %699 = vmatprep.subr.bf16.mxu0 0
        %700 = vmatpush1.bf16.msra.mxu0 %v653
        %701 = vmatprep.subr.bf16.mxu0 0
        %702 = vmatpush1.bf16.msra.mxu0 %v654
        %703 = vmatprep.subr.bf16.mxu0 0
        %704 = vmatpush1.bf16.msra.mxu0 0
        %705 = vmatprep.subr.bf16.mxu0 0
        %706 = vmatpush1.bf16.msra.mxu0 0
        %707 = vmatprep.subr.bf16.mxu0 0
        %708 = vmatpush1.bf16.msra.mxu0 0
        %709 = vmatprep.subr.bf16.mxu0 0
        %710 = vmatpush1.bf16.msra.mxu0 0
        %711 = vmatprep.subr.bf16.mxu0 0
        %712 = vmatpush1.bf16.msra.mxu0 0
        %713 = vmatprep.subr.bf16.mxu0 0
        %714 = vmatpush1.bf16.msra.mxu0 0
        %715 = vmatprep.subr.bf16.mxu0 0
        %716 = vmatpush1.bf16.msra.mxu0 0
        %717 = vmatprep.subr.bf16.mxu0 0
        %718 = vmatpush1.bf16.msra.mxu0 0
        %719 = vmatprep.subr.bf16.mxu0 0
        %720 = vmatpush1.bf16.msra.mxu0 0
        %721 = vmatprep.subr.bf16.mxu0 0
        %722 = vmatpush1.bf16.msra.mxu0 0
        %723 = vmatprep.subr.bf16.mxu0 0
        %724 = vmatpush1.bf16.msra.mxu0 0
        %725 = vmatprep.subr.bf16.mxu0 0
        %726 = vmatpush1.bf16.msra.mxu0 0
        %727 = vmatprep.subr.bf16.mxu0 0
        %728 = vmatpush1.bf16.msra.mxu0 0
        %729 = vmatprep.subr.bf16.mxu0 0
        %730 = vmatpush1.bf16.msra.mxu0 0
        %731 = vmatprep.mubr.bf16.mxu0 0
        %732 = vmatmul.mubr.bf16.gmra.mrb[0].mxu0 %v694
        %v733 = vpop.f32.mrb[0].mxu0
        %v734 = vadd.f32 %v666, %v733
        %v735 = vpop.f32.mrb[0].mxu0
        %v736 = vpop.f32.mrb[0].mxu0
        %v737 = vadd.f32 %v671, %v736
        %v738 = vpop.f32.mrb[0].mxu0
        %739 = vmatprep.mubr.bf16.mxu0 0
        %740 = vmatmul.mubr.bf16.gmra.mrb[0].mxu0 %v697
        %v741 = vpop.f32.mrb[0].mxu0
        %v742 = vadd.f32 %v676, %v741
        %v743 = vpop.f32.mrb[0].mxu0
        %v744 = vpop.f32.mrb[0].mxu0
        %v745 = vadd.f32 %v681, %v744
        %v746 = vpop.f32.mrb[0].mxu0
        %747 = vdwg.mxu0
        %v748 = vmax.f32 %v734, 0.0
        %v749 = vmax.f32 %v737, 0.0
        %v750 = vmax.f32 %v742, 0.0
        %v751 = vmax.f32 %v745, 0.0
        %v752 = vpack.c.bf16 %v749, %v748
        %v753 = vpack.c.bf16 %v751, %v750
        %v754 = vld [vmem:[%s7] sm:$0xf]
        %v755 = vld [vmem:[%s7 + $0x4] sm:$0xf]
        %v756 = vld [vmem:[%s7 + $0x8] sm:$0xf]
        %v757 = vld [vmem:[%s7 + $0xc] sm:$0xf]
        %v758 = vld [vmem:[%s8] sm:$0xff]
        %v759 = vld [vmem:[%s8 + $0x8] sm:$0xff]
        %v760 = vld [vmem:[%s8 + $0x10] sm:$0xff]
        %v761 = vld [vmem:[%s8 + $0x18] sm:$0xff]
        %763 = vset.pattern.permute.xlu0 0
        %764 = vperm.xlu0 %763, %v758
        %v765 = vpop.permute.xlu0 %764
        %768 = vset.pattern.permute.xlu0 0
        %769 = vperm.xlu0 %768, %v759
        %v770 = vpop.permute.xlu0 %769
        %773 = vset.pattern.permute.xlu0 0
        %774 = vperm.xlu0 %773, %v760
        %v775 = vpop.permute.xlu0 %774
        %778 = vset.pattern.permute.xlu0 0
        %779 = vperm.xlu0 %778, %v761
        %v780 = vpop.permute.xlu0 %779
        %v786 = vunpack.c.l.b16 %v754
        %v787 = vunpack.c.l.b16 %v755
        %v788 = vunpack.c.l.b16 %v756
        %v789 = vunpack.c.l.b16 %v757
        %v790 = vpack.c.b16 %v787, %v786
        %v791 = vpack.c.b16 %v789, %v788
        %v793 = vsel %vm494, %v790, 0
        %v796 = vsel %vm494, %v791, 0
        %798 = vmatprep.subr.bf16.mxu0 0
        %799 = vmatpush1.bf16.msra.mxu0 %v752
        %800 = vmatprep.subr.bf16.mxu0 0
        %801 = vmatpush1.bf16.msra.mxu0 %v753
        %802 = vmatprep.subr.bf16.mxu0 0
        %803 = vmatpush1.bf16.msra.mxu0 0
        %804 = vmatprep.subr.bf16.mxu0 0
        %805 = vmatpush1.bf16.msra.mxu0 0
        %806 = vmatprep.subr.bf16.mxu0 0
        %807 = vmatpush1.bf16.msra.mxu0 0
        %808 = vmatprep.subr.bf16.mxu0 0
        %809 = vmatpush1.bf16.msra.mxu0 0
        %810 = vmatprep.subr.bf16.mxu0 0
        %811 = vmatpush1.bf16.msra.mxu0 0
        %812 = vmatprep.subr.bf16.mxu0 0
        %813 = vmatpush1.bf16.msra.mxu0 0
        %814 = vmatprep.subr.bf16.mxu0 0
        %815 = vmatpush1.bf16.msra.mxu0 0
        %816 = vmatprep.subr.bf16.mxu0 0
        %817 = vmatpush1.bf16.msra.mxu0 0
        %818 = vmatprep.subr.bf16.mxu0 0
        %819 = vmatpush1.bf16.msra.mxu0 0
        %820 = vmatprep.subr.bf16.mxu0 0
        %821 = vmatpush1.bf16.msra.mxu0 0
        %822 = vmatprep.subr.bf16.mxu0 0
        %823 = vmatpush1.bf16.msra.mxu0 0
        %824 = vmatprep.subr.bf16.mxu0 0
        %825 = vmatpush1.bf16.msra.mxu0 0
        %826 = vmatprep.subr.bf16.mxu0 0
        %827 = vmatpush1.bf16.msra.mxu0 0
        %828 = vmatprep.subr.bf16.mxu0 0
        %829 = vmatpush1.bf16.msra.mxu0 0
        %830 = vmatprep.mubr.bf16.mxu0 0
        %831 = vmatmul.mubr.bf16.gmra.mrb[0].mxu0 %v793
        %v832 = vpop.f32.mrb[0].mxu0
        %v833 = vadd.f32 %v765, %v832
        %v834 = vpop.f32.mrb[0].mxu0
        %v835 = vpop.f32.mrb[0].mxu0
        %v836 = vadd.f32 %v770, %v835
        %v837 = vpop.f32.mrb[0].mxu0
        %838 = vmatprep.mubr.bf16.mxu0 0
        %839 = vmatmul.mubr.bf16.gmra.mrb[0].mxu0 %v796
        %v840 = vpop.f32.mrb[0].mxu0
        %v841 = vadd.f32 %v775, %v840
        %v842 = vpop.f32.mrb[0].mxu0
        %v843 = vpop.f32.mrb[0].mxu0
        %v844 = vadd.f32 %v780, %v843
        %v845 = vpop.f32.mrb[0].mxu0
        %846 = vdwg.mxu0
        %v847 = vmax.f32 %v833, 0.0
        %v848 = vmax.f32 %v836, 0.0
        %v849 = vmax.f32 %v841, 0.0
        %v850 = vmax.f32 %v844, 0.0
        %v851 = vpack.c.bf16 %v848, %v847
        %v852 = vpack.c.bf16 %v850, %v849
        %v853 = vld [vmem:[%s9] sm:$0x1]
        %v854 = vld [vmem:[#allocation2] sm:$0x1]
        %856 = vset.pattern.permute.xlu0 0
        %857 = vperm.xlu0 %856, %v854
        %v858 = vpop.permute.xlu0 %857
        %v860 = vlaneseq
        %v861 = vshrl.u32 %v860, 7
        %v862 = vsub.s32 0, %v861
        %v863 = vrot.slane %v858, %v862
        %v865 = vsel %vm494, %v853, 0
        %867 = vmatprep.subr.bf16.mxu0 0
        %868 = vmatpush1.bf16.msra.mxu0 %v851
        %869 = vmatprep.subr.bf16.mxu0 0
        %870 = vmatpush1.bf16.msra.mxu0 %v852
        %871 = vmatprep.subr.bf16.mxu0 0
        %872 = vmatpush1.bf16.msra.mxu0 0
        %873 = vmatprep.subr.bf16.mxu0 0
        %874 = vmatpush1.bf16.msra.mxu0 0
        %875 = vmatprep.subr.bf16.mxu0 0
        %876 = vmatpush1.bf16.msra.mxu0 0
        %877 = vmatprep.subr.bf16.mxu0 0
        %878 = vmatpush1.bf16.msra.mxu0 0
        %879 = vmatprep.subr.bf16.mxu0 0
        %880 = vmatpush1.bf16.msra.mxu0 0
        %881 = vmatprep.subr.bf16.mxu0 0
        %882 = vmatpush1.bf16.msra.mxu0 0
        %883 = vmatprep.subr.bf16.mxu0 0
        %884 = vmatpush1.bf16.msra.mxu0 0
        %885 = vmatprep.subr.bf16.mxu0 0
        %886 = vmatpush1.bf16.msra.mxu0 0
        %887 = vmatprep.subr.bf16.mxu0 0
        %888 = vmatpush1.bf16.msra.mxu0 0
        %889 = vmatprep.subr.bf16.mxu0 0
        %890 = vmatpush1.bf16.msra.mxu0 0
        %891 = vmatprep.subr.bf16.mxu0 0
        %892 = vmatpush1.bf16.msra.mxu0 0
        %893 = vmatprep.subr.bf16.mxu0 0
        %894 = vmatpush1.bf16.msra.mxu0 0
        %895 = vmatprep.subr.bf16.mxu0 0
        %896 = vmatpush1.bf16.msra.mxu0 0
        %897 = vmatprep.subr.bf16.mxu0 0
        %898 = vmatpush1.bf16.msra.mxu0 0
        %899 = vmatprep.mubr.bf16.mxu0 0
        %900 = vmatmul.mubr.bf16.gmra.mrb[0].mxu0 %v865
        %v901 = vpop.f32.mrb[0].mxu0
        %v902 = vadd.f32 %v863, %v901
        %v903 = vpop.f32.mrb[0].mxu0
        %v904 = vpop.f32.mrb[0].mxu0
        %v905 = vpop.f32.mrb[0].mxu0
        %906 = vdwg.mxu0
        %907 = vst [vmem:[%s438] sm:$0x1] %v902
        %s908 = sand.u32 %s271, 1
        %s909 = scalar_lea.sflag [#allocation5], %s908
        %s910 = sand.u32 %s271, 1
        %s911 = scalar_lea.vmem [#allocation4], %s910
        // Predicated region
        $region106: #{tpu_custom_call.1} parent=100 // pred_check
          %p912 = pneg %p281
        $region107: #{tpu_custom_call.1} parent=100 // pred_check_branch
          %914 = sbr.rel (%p912) target = $region109
        $region108: #{tpu_custom_call.1} parent=100 // pred_region
          %s916 = ssub.s32 16, 16
          %917 = vsyncadd %s909, %s916
          %s918 = smul.addr %s27, 16
          %s919 = scalar_lea.hbm %s11, %s918
          %s921 = sshll.u32 %s911, 4
          %s922 = int_to_ptr.vmem [resolvable:$true] %s921
          %924 = dma.vmem_to_hbm [thread:$0]  %s922, 16, %s919, %s909
        $region109: #{tpu_custom_call.1} parent=100 // pred_fallthru
          _
      $region101: #{tpu_custom_call.1} parent=5 // pred_fallthru
        _
      %p925 = scmp.le.s32.totalorder 2, %s22
      // Predicated region
      $region110: #{tpu_custom_call.1} parent=5 // pred_check
        %p926 = pneg %p925
      $region111: #{tpu_custom_call.1} parent=5 // pred_check_branch
        %928 = sbr.rel (%p926) target = $region113
      $region112: #{tpu_custom_call.1} parent=5 // pred_region
        %s929 = ssub.s32 %s22, 2
        // Predicated region
        $region114: #{tpu_custom_call.1} parent=112 // pred_check
          %p930 = pneg %p287
        $region115: #{tpu_custom_call.1} parent=112 // pred_check_branch
          %932 = sbr.rel (%p930) target = $region117
        $region116: #{tpu_custom_call.1} parent=112 // pred_region
          %s933 = sand.u32 %s272, 1
          %s934 = scalar_lea.sflag [#allocation5], %s933
          %s935 = sand.u32 %s272, 1
          %s936 = scalar_lea.vmem [#allocation4], %s935
          %937 = dma.done %s934, 16
        $region117: #{tpu_custom_call.1} parent=112 // pred_fallthru
          _
      $region113: #{tpu_custom_call.1} parent=5 // pred_fallthru
        _
    $region6: #{tpu_custom_call.1} parent=1 // loop_footer
      %s26 = sadd.s32 1, %s22
    $region7: #{tpu_custom_call.1} parent=1 // loop_footer_branch
      %21 = sbr.rel target = $region3
    $region8: #{tpu_custom_call.1} parent=1 // loop_exit
      _
    %938 = vsyncpa [#allocation5], 1
    %s939 = scalar_lea.sflag [#allocation5], 1
    %940 = vsyncpa %s939, 1

</llo_original>
